<compile_context>
chip_gen: v5e
topology: v5e:2x2
jax: 0.10.0
libtpu: 0.0.40
codegen_flags: <defaults>
</compile_context>

<pallas_src>
import functools

import jax
import jax.numpy as jnp
from jax.experimental import pallas as pl
from jax.experimental.pallas import tpu as pltpu

LANE = 128             # TPU lane width: feature/class dims are padded to this
_MAX_BATCH_TILE = 256  # batch tile; comfortably fits v7x VMEM with 2x buffering


def _round_up(x, m):
    return (x + m - 1) // m * m


def _batch_tiling(n):
    """Round batch up to a sublane multiple and pick a grid tile."""
    n8 = _round_up(max(n, 1), 8)
    tile = min(n8, _MAX_BATCH_TILE)
    return _round_up(n8, tile), tile


# ----------------------------------------------------------------------------
# Fused kernel: per-view MLP -> per-sample transfer -> DS-Combin across views
# ----------------------------------------------------------------------------
def _tmnr_fused_kernel(*refs, views, classes, layer_counts, training):
    """One batch-tile of the whole TMNR forward.

    Ref layout (inputs, then outputs):
      inputs : for each view v: x_v, then (w, b) * layer_counts[v]
               then (training only) for each view v: mt_v, the gathered
               per-sample transfer matrix TRANSPOSED: mt[n, j, c] = M[n, c, j]
      outputs: new_evidence_v for each view (lane-padded), evidence_a (lane-padded)
    """
    # ---- unpack refs --------------------------------------------------------
    pos = 0
    x_refs, w_refs = [], []
    for v in range(views):
        x_refs.append(refs[pos]); pos += 1
        w_refs.append(refs[pos:pos + 2 * layer_counts[v]])
        pos += 2 * layer_counts[v]
    mt_refs = None
    if training:
        mt_refs = refs[pos:pos + views]
        pos += views
    out_refs = refs[pos:]
    new_refs, eva_ref = out_refs[:views], out_refs[views]

    cf = float(classes)
    tile = x_refs[0].shape[0]
    pc = eva_ref.shape[-1]                       # lane-padded class dim

    # Hoisted constants (built once per grid step, not per view/layer).
    lane = jax.lax.broadcasted_iota(jnp.int32, (tile, pc), 1)
    class_mask = (lane < classes).astype(jnp.float32)
    if training:
        r_i = jax.lax.broadcasted_iota(jnp.int32, (classes, pc), 0)
        c_i = jax.lax.broadcasted_iota(jnp.int32, (classes, pc), 1)
        place = (r_i == c_i).astype(jnp.float32)  # (classes, pc) scatter-to-lane-dense

    # ---- per-view classifier MLP (all layers fused, weights VMEM-resident) --
    def classifier(v):
        h = x_refs[v][...]
        n_layers = layer_counts[v]
        for l in range(n_layers):
            w = w_refs[v][2 * l][...]
            b = w_refs[v][2 * l + 1][...]
            # TODO(synk): for real-sized (hundreds+) classifier dims, cast h/w
            #             to bf16 here (keep f32 accumulation) for full MXU
            #             rate on v6e/v7x.
            h = jnp.dot(h, w, preferred_element_type=jnp.float32) + b
            if l < n_layers - 1:
                h = jnp.maximum(h, 0.0)                       # ReLU
            else:
                # torch.nn.Softplus(beta=1, threshold=20)
                h = jnp.where(h > 20.0, h,
                              jnp.log1p(jnp.exp(jnp.minimum(h, 20.0))))
                h = h * class_mask                            # zero padded class lanes
        return h                                              # (tile, pc), pads == 0

    # ---- transfer by per-sample noise matrix -------------------------------
    new_E = []
    for v in range(views):
        ev = classifier(v)                                    # evidence (lane padded)
        if training:
            e_small = ev[:, :classes]                         # (tile, C)
            mt = mt_refs[v][...]                              # (tile, C, C), mt[n, j, c]
            # out[n, j] = sum_c evidence[n, c] * M[n, c, j]   (lane-axis reduce, C tiny)
            t = jnp.sum(e_small[:, None, :] * mt, axis=-1)    # (tile, C)
            # scatter back to the lane-dense padded layout (tiny MXU dot)
            e_new = jnp.dot(t, place, preferred_element_type=jnp.float32)
        else:
            e_new = ev
        new_refs[v][...] = e_new.astype(new_refs[v].dtype)
        new_E.append(e_new)

    # ---- DS_Combin (evidence space: E = alpha - 1; padded lanes stay 0) ----
    # Algebra: b_a * S_a cancels the (1 - conflict) factor exactly, so
    #   e_a = (b1*b2 + b1*u2 + b2*u1) * S1 * S2 / classes
    # 1/S1, 1/S2 are EUP reciprocals; no divide-by-(1-C) remains (so the
    # reference's NaN edge case at total conflict never occurs here).
    def ds_combin_two(E1, E2):
        s1 = jnp.sum(E1, axis=-1, keepdims=True) + cf         # = sum(alpha1)
        s2 = jnp.sum(E2, axis=-1, keepdims=True) + cf
        r1 = pl.reciprocal(s1, approx=True)
        r2 = pl.reciprocal(s2, approx=True)
        b1, b2 = E1 * r1, E2 * r2
        u1, u2 = cf * r1, cf * r2
        num_b = b1 * b2 + b1 * u2 + b2 * u1
        return num_b * (s1 * s2) * (1.0 / cf)                 # combined evidence

    E_a = ds_combin_two(new_E[0], new_E[1])
    for v in range(1, views - 1):
        E_a = ds_combin_two(E_a, new_E[v + 1])
    eva_ref[...] = E_a.astype(eva_ref.dtype)


# ----------------------------------------------------------------------------
# Parameter init (weights pre-transposed + zero-padded to lane-dense tiles)
# ----------------------------------------------------------------------------
def init_classifier_params(key, dims, classes):
    """Layers dims[i]->dims[i+1] (ReLU), dims[-1]->classes (Softplus).
    Weights stored as (Din_pad, Dout_pad); bias as (1, Dout_pad)."""
    layer_dims = list(zip(dims[:-1], dims[1:])) + [(dims[-1], classes)]
    params = []
    for (din, dout) in layer_dims:
        key, kw, kb = jax.random.split(key, 3)
        bound = 1.0 / (din ** 0.5)
        w = jax.random.uniform(kw, (din, dout), jnp.float32, -bound, bound)
        b = jax.random.uniform(kb, (dout,), jnp.float32, -bound, bound)
        w_pad = jnp.pad(w, ((0, _round_up(din, LANE) - din),
                            (0, _round_up(dout, LANE) - dout)))
        b_pad = jnp.pad(b, (0, _round_up(dout, LANE) - dout)).reshape(1, -1)
        params.append((w_pad, b_pad))
    return params


def init_tmnr_params(key, classes, views, classifier_dims, sample_num):
    cls_params = []
    for v in range(views):
        key, sub = jax.random.split(key)
        cls_params.append(init_classifier_params(sub, classifier_dims[v], classes))
    # self.matrixes = eye(classes) expanded to (views, sample_num, classes, classes)
    matrixes = jnp.broadcast_to(
        jnp.eye(classes, dtype=jnp.float32), (views, sample_num, classes, classes))
    return {"classifiers": cls_params, "matrixes": matrixes}


# ----------------------------------------------------------------------------
# Forward wrapper: one pallas_call for the whole TMNR forward
# ----------------------------------------------------------------------------
def tmnr_forward(params, X, y, indexes, classes, views, training=True):
    del y  # only used by the (unimplemented) loss terms
    n = X[0].shape[0]
    n_pad, tile = _batch_tiling(n)
    pc = _round_up(classes, LANE)

    cls_params = params["classifiers"]
    layer_counts = tuple(len(p) for p in cls_params)

    inputs, in_specs = [], []
    for v in range(views):
        x = X[v]
        din = x.shape[1]
        din_pad = cls_params[v][0][0].shape[0]
        x_pad = jnp.pad(x.astype(jnp.float32), ((0, n_pad - n), (0, din_pad - din)))
        inputs.append(x_pad)
        in_specs.append(pl.BlockSpec((tile, din_pad), lambda i: (i, 0)))
        for (w, b) in cls_params[v]:
            inputs += [w, b]
            in_specs += [pl.BlockSpec(w.shape, lambda i: (0, 0)),   # VMEM-resident
                         pl.BlockSpec(b.shape, lambda i: (0, 0))]

    if training:
        for v in range(views):
            # Per-sample transfer matrices: gather + transpose + pad is tiny XLA
            # glue that fuses with the gather itself.
            # TODO(synk): for non-toy sample_num, move this gather into the kernel
            #             via PrefetchScalarGridSpec(num_scalar_prefetch=1) with
            #             `indexes` in SMEM and an index_map over matrixes[v].
            sel = jnp.take(params["matrixes"][v], indexes, axis=0)   # (n, C, C)
            mt = jnp.swapaxes(sel, 1, 2)                             # mt[n, j, c]
            mt = jnp.pad(mt, ((0, n_pad - n), (0, 0), (0, 0)))
            inputs.append(mt)
            in_specs.append(pl.BlockSpec((tile, classes, classes), lambda i: (i, 0, 0)))

    out_shape = tuple(jax.ShapeDtypeStruct((n_pad, pc), jnp.float32)
                      for _ in range(views + 1))
    out_specs = [pl.BlockSpec((tile, pc), lambda i: (i, 0))
                 for _ in range(views + 1)]

    outs = pl.pallas_call(
        functools.partial(_tmnr_fused_kernel, views=views, classes=classes,
                          layer_counts=layer_counts, training=training),
        out_shape=out_shape,
        grid_spec=pltpu.PrefetchScalarGridSpec(
            num_scalar_prefetch=0,
            grid=(n_pad // tile,),
            in_specs=in_specs,
            out_specs=out_specs),
        compiler_params=pltpu.CompilerParams(
            dimension_semantics=("parallel",)),   # batch axis: 2-TC sharding on v7x
    )(*inputs)

    new_evidence = [outs[v][:n, :classes] for v in range(views)]
    evidence_a = outs[views][:n, :classes]

    # TODO(synk): ce_loss / conf_loss / similarity_loss / consistent_view_loss
    #             are not defined in the reference source; loss stays 0.
    loss = jnp.float32(0.0)
    return new_evidence, evidence_a, loss


# ----------------------------------------------------------------------------
# Pure-JAX reference (mirrors the PyTorch formulas) for a correctness check
# ----------------------------------------------------------------------------
def _reference_forward(params, X, indexes, classes, views):
    hi = jax.lax.Precision.HIGHEST
    evidences = []
    for v in range(views):
        h = X[v].astype(jnp.float32)
        plist = params["classifiers"][v]
        for l, (w, b) in enumerate(plist):
            h = jnp.dot(h, w[:h.shape[1], :], precision=hi) + b[0]
            if l < len(plist) - 1:
                h = jnp.maximum(h, 0.0)
            else:
                h = jnp.where(h > 20.0, h, jnp.log1p(jnp.exp(jnp.minimum(h, 20.0))))
        evidences.append(h[:, :classes])

    new_ev = []
    for v in range(views):
        M = params["matrixes"][v][indexes]
        new_ev.append(jnp.einsum('nc,ncj->nj', evidences[v], M, precision=hi))
    alpha = [e + 1.0 for e in new_ev]

    def ds_two(a1, a2):
        s1 = a1.sum(1, keepdims=True); s2 = a2.sum(1, keepdims=True)
        e1, e2 = a1 - 1.0, a2 - 1.0
        b1, b2 = e1 / s1, e2 / s2
        u1, u2 = classes / s1, classes / s2
        conflict = b1.sum(1, keepdims=True) * b2.sum(1, keepdims=True) \
            - (b1 * b2).sum(1, keepdims=True)
        b_a = (b1 * b2 + b1 * u2 + b2 * u1) / (1.0 - conflict)
        u_a = u1 * u2 / (1.0 - conflict)
        s_a = classes / u_a
        return b_a * s_a + 1.0

    alpha_a = ds_two(alpha[0], alpha[1])
    for v in range(1, views - 1):
        alpha_a = ds_two(alpha_a, alpha[v + 1])
    return new_ev, alpha_a - 1.0


# ----------------------------------------------------------------------------
if __name__ == "__main__":
    classes = 4
    views = 2
    sample_num = 16
    batch = 8
    classifier_dims = [[32, 16], [24, 16]]

    key = jax.random.PRNGKey(0)
    key, k_p, k_x0, k_x1, k_y, k_idx, k_m = jax.random.split(key, 7)

    params = init_tmnr_params(k_p, classes, views, classifier_dims, sample_num)
    # Use non-identity ("as-if-trained") transfer matrices so the reference
    # check actually exercises the transfer path (identity hides layout bugs).
    params["matrixes"] = jax.random.uniform(
        k_m, (views, sample_num, classes, classes), jnp.float32, 0.0, 1.0)

    X = [
        jax.random.normal(k_x0, (batch, classifier_dims[0][0]), jnp.float32),
        jax.random.normal(k_x1, (batch, classifier_dims[1][0]), jnp.float32),
    ]
    y_labels = jax.random.randint(k_y, (batch,), 0, classes)
    y = jax.nn.one_hot(y_labels, classes, dtype=jnp.float32)
    indexes = jax.random.randint(k_idx, (batch,), 0, sample_num)

    fwd = jax.jit(functools.partial(
        tmnr_forward, classes=classes, views=views, training=True))
    new_evidence, evidence_a, loss = fwd(params, X, y, indexes)
    jax.block_until_ready(new_evidence)
    jax.block_until_ready(evidence_a)
    jax.block_until_ready(loss)

    assert evidence_a.shape == (batch, classes)
    assert all(ne.shape == (batch, classes) for ne in new_evidence)

    ref_new, ref_a = _reference_forward(params, X, indexes, classes, views)
    for v in range(views):
        assert jnp.allclose(new_evidence[v], ref_new[v], rtol=5e-2, atol=1e-2)
    assert jnp.allclose(evidence_a, ref_a, rtol=5e-2, atol=1e-2)

    print("KERNEL_OK")
</pallas_src>

<mosaic_0001>
module attributes {stable_mosaic.version = 11 : i64} {
  func.func @_tmnr_fused_kernel(%arg0: i32, %arg1: memref<8x128xf32, #tpu.memory_space<vmem>>, %arg2: memref<128x128xf32, #tpu.memory_space<vmem>>, %arg3: memref<1x128xf32, #tpu.memory_space<vmem>>, %arg4: memref<128x128xf32, #tpu.memory_space<vmem>>, %arg5: memref<1x128xf32, #tpu.memory_space<vmem>>, %arg6: memref<8x128xf32, #tpu.memory_space<vmem>>, %arg7: memref<128x128xf32, #tpu.memory_space<vmem>>, %arg8: memref<1x128xf32, #tpu.memory_space<vmem>>, %arg9: memref<128x128xf32, #tpu.memory_space<vmem>>, %arg10: memref<1x128xf32, #tpu.memory_space<vmem>>, %arg11: memref<8x4x4xf32, #tpu.memory_space<vmem>>, %arg12: memref<8x4x4xf32, #tpu.memory_space<vmem>>, %arg13: memref<8x128xf32, #tpu.memory_space<vmem>>, %arg14: memref<8x128xf32, #tpu.memory_space<vmem>>, %arg15: memref<8x128xf32, #tpu.memory_space<vmem>>) attributes {dimension_semantics = [#tpu.dimension_semantics<parallel>], iteration_bounds = array<i64: 1>, scalar_prefetch = 0 : i64, scratch_operands = 0 : i64, tpu.core_type = #tpu.core_type<tc>, window_params = [{transform_indices = @transform_0, window_bounds = array<i64: 8, 128>}, {pipeline_mode = #tpu.pipeline_mode<synchronous>, transform_indices = @transform_1, window_bounds = array<i64: 128, 128>}, {pipeline_mode = #tpu.pipeline_mode<synchronous>, transform_indices = @transform_2, window_bounds = array<i64: 1, 128>}, {pipeline_mode = #tpu.pipeline_mode<synchronous>, transform_indices = @transform_3, window_bounds = array<i64: 128, 128>}, {pipeline_mode = #tpu.pipeline_mode<synchronous>, transform_indices = @transform_4, window_bounds = array<i64: 1, 128>}, {transform_indices = @transform_5, window_bounds = array<i64: 8, 128>}, {pipeline_mode = #tpu.pipeline_mode<synchronous>, transform_indices = @transform_6, window_bounds = array<i64: 128, 128>}, {pipeline_mode = #tpu.pipeline_mode<synchronous>, transform_indices = @transform_7, window_bounds = array<i64: 1, 128>}, {pipeline_mode = #tpu.pipeline_mode<synchronous>, transform_indices = @transform_8, window_bounds = array<i64: 128, 128>}, {pipeline_mode = #tpu.pipeline_mode<synchronous>, transform_indices = @transform_9, window_bounds = array<i64: 1, 128>}, {transform_indices = @transform_10, window_bounds = array<i64: 8, 4, 4>}, {transform_indices = @transform_11, window_bounds = array<i64: 8, 4, 4>}, {transform_indices = @transform_12, window_bounds = array<i64: 8, 128>}, {transform_indices = @transform_13, window_bounds = array<i64: 8, 128>}, {transform_indices = @transform_14, window_bounds = array<i64: 8, 128>}]} {
    %0 = tpu.iota {dimensions = array<i32: 1>} : vector<8x128xi32>
    %c4_i32 = arith.constant 4 : i32
    %1 = vector.broadcast %c4_i32 : i32 to vector<8x128xi32>
    %2 = arith.cmpi slt, %0, %1 : vector<8x128xi32>
    %3 = arith.extui %2 : vector<8x128xi1> to vector<8x128xi32>
    %4 = arith.sitofp %3 : vector<8x128xi32> to vector<8x128xf32>
    %5 = tpu.iota {dimensions = array<i32: 0>} : vector<4x128xi32>
    %6 = tpu.iota {dimensions = array<i32: 1>} : vector<4x128xi32>
    %7 = arith.cmpi eq, %5, %6 : vector<4x128xi32>
    %8 = arith.extui %7 : vector<4x128xi1> to vector<4x128xi32>
    %9 = arith.sitofp %8 : vector<4x128xi32> to vector<4x128xf32>
    %c0 = arith.constant 0 : index
    %c0_0 = arith.constant 0 : index
    %10 = vector.load %arg1[%c0, %c0_0] : memref<8x128xf32, #tpu.memory_space<vmem>>, vector<8x128xf32>
    %c0_1 = arith.constant 0 : index
    %c0_2 = arith.constant 0 : index
    %11 = vector.load %arg2[%c0_1, %c0_2] : memref<128x128xf32, #tpu.memory_space<vmem>>, vector<128x128xf32>
    %c0_3 = arith.constant 0 : index
    %c0_4 = arith.constant 0 : index
    %12 = vector.load %arg3[%c0_3, %c0_4] : memref<1x128xf32, #tpu.memory_space<vmem>>, vector<1x128xf32>
    %cst = arith.constant dense<0.000000e+00> : vector<8x128xf32>
    %13 = tpu.matmul %10, %11, %cst {dimension_numbers = #tpu.dot_dimension_numbers<[1], [0], [0], [1], [0, 0, 1, 1], [], []>} : vector<8x128xf32>, vector<128x128xf32>, vector<8x128xf32> -> vector<8x128xf32>
    %14 = vector.broadcast %12 : vector<1x128xf32> to vector<8x128xf32>
    %15 = arith.addf %13, %14 : vector<8x128xf32>
    %cst_5 = arith.constant 0.000000e+00 : f32
    %16 = vector.broadcast %cst_5 : f32 to vector<8x128xf32>
    %17 = arith.maximumf %15, %16 : vector<8x128xf32>
    %c0_6 = arith.constant 0 : index
    %c0_7 = arith.constant 0 : index
    %18 = vector.load %arg4[%c0_6, %c0_7] : memref<128x128xf32, #tpu.memory_space<vmem>>, vector<128x128xf32>
    %c0_8 = arith.constant 0 : index
    %c0_9 = arith.constant 0 : index
    %19 = vector.load %arg5[%c0_8, %c0_9] : memref<1x128xf32, #tpu.memory_space<vmem>>, vector<1x128xf32>
    %cst_10 = arith.constant dense<0.000000e+00> : vector<8x128xf32>
    %20 = tpu.matmul %17, %18, %cst_10 {dimension_numbers = #tpu.dot_dimension_numbers<[1], [0], [0], [1], [0, 0, 1, 1], [], []>} : vector<8x128xf32>, vector<128x128xf32>, vector<8x128xf32> -> vector<8x128xf32>
    %21 = vector.broadcast %19 : vector<1x128xf32> to vector<8x128xf32>
    %22 = arith.addf %20, %21 : vector<8x128xf32>
    %cst_11 = arith.constant 2.000000e+01 : f32
    %23 = vector.broadcast %cst_11 : f32 to vector<8x128xf32>
    %24 = arith.cmpf ogt, %22, %23 : vector<8x128xf32>
    %cst_12 = arith.constant 2.000000e+01 : f32
    %25 = vector.broadcast %cst_12 : f32 to vector<8x128xf32>
    %26 = arith.minimumf %22, %25 : vector<8x128xf32>
    %27 = math.exp %26 : vector<8x128xf32>
    %28 = math.log1p %27 : vector<8x128xf32>
    %29 = arith.select %24, %22, %28 : vector<8x128xi1>, vector<8x128xf32>
    %30 = arith.mulf %29, %4 : vector<8x128xf32>
    %31 = vector.extract_strided_slice %30 {offsets = [0, 0], sizes = [8, 4], strides = [1, 1]} : vector<8x128xf32> to vector<8x4xf32>
    %c0_13 = arith.constant 0 : index
    %c0_14 = arith.constant 0 : index
    %c0_15 = arith.constant 0 : index
    %32 = vector.load %arg11[%c0_13, %c0_14, %c0_15] : memref<8x4x4xf32, #tpu.memory_space<vmem>>, vector<8x4x4xf32>
    %33 = vector.shape_cast %31 : vector<8x4xf32> to vector<8x1x4xf32>
    %34 = vector.broadcast %33 : vector<8x1x4xf32> to vector<8x4x4xf32>
    %35 = arith.mulf %34, %32 : vector<8x4x4xf32>
    %cst_16 = arith.constant dense<0.000000e+00> : vector<8x4xf32>
    %36 = vector.multi_reduction <add>, %35, %cst_16 [2] : vector<8x4x4xf32> to vector<8x4xf32>
    %cst_17 = arith.constant dense<0.000000e+00> : vector<8x128xf32>
    %37 = tpu.matmul %36, %9, %cst_17 {dimension_numbers = #tpu.dot_dimension_numbers<[1], [0], [0], [1], [0, 0, 1, 1], [], []>} : vector<8x4xf32>, vector<4x128xf32>, vector<8x128xf32> -> vector<8x128xf32>
    %c0_18 = arith.constant 0 : index
    %c0_19 = arith.constant 0 : index
    %38 = vector.load %arg13[%c0_18, %c0_19] : memref<8x128xf32, #tpu.memory_space<vmem>>, vector<8x128xf32>
    tpu.vector_store %arg13[%c0_18, %c0_19], %37 {strides = array<i32>} : memref<8x128xf32, #tpu.memory_space<vmem>>, vector<8x128xf32>,
    %c0_20 = arith.constant 0 : index
    %c0_21 = arith.constant 0 : index
    %39 = vector.load %arg6[%c0_20, %c0_21] : memref<8x128xf32, #tpu.memory_space<vmem>>, vector<8x128xf32>
    %c0_22 = arith.constant 0 : index
    %c0_23 = arith.constant 0 : index
    %40 = vector.load %arg7[%c0_22, %c0_23] : memref<128x128xf32, #tpu.memory_space<vmem>>, vector<128x128xf32>
    %c0_24 = arith.constant 0 : index
    %c0_25 = arith.constant 0 : index
    %41 = vector.load %arg8[%c0_24, %c0_25] : memref<1x128xf32, #tpu.memory_space<vmem>>, vector<1x128xf32>
    %cst_26 = arith.constant dense<0.000000e+00> : vector<8x128xf32>
    %42 = tpu.matmul %39, %40, %cst_26 {dimension_numbers = #tpu.dot_dimension_numbers<[1], [0], [0], [1], [0, 0, 1, 1], [], []>} : vector<8x128xf32>, vector<128x128xf32>, vector<8x128xf32> -> vector<8x128xf32>
    %43 = vector.broadcast %41 : vector<1x128xf32> to vector<8x128xf32>
    %44 = arith.addf %42, %43 : vector<8x128xf32>
    %cst_27 = arith.constant 0.000000e+00 : f32
    %45 = vector.broadcast %cst_27 : f32 to vector<8x128xf32>
    %46 = arith.maximumf %44, %45 : vector<8x128xf32>
    %c0_28 = arith.constant 0 : index
    %c0_29 = arith.constant 0 : index
    %47 = vector.load %arg9[%c0_28, %c0_29] : memref<128x128xf32, #tpu.memory_space<vmem>>, vector<128x128xf32>
    %c0_30 = arith.constant 0 : index
    %c0_31 = arith.constant 0 : index
    %48 = vector.load %arg10[%c0_30, %c0_31] : memref<1x128xf32, #tpu.memory_space<vmem>>, vector<1x128xf32>
    %cst_32 = arith.constant dense<0.000000e+00> : vector<8x128xf32>
    %49 = tpu.matmul %46, %47, %cst_32 {dimension_numbers = #tpu.dot_dimension_numbers<[1], [0], [0], [1], [0, 0, 1, 1], [], []>} : vector<8x128xf32>, vector<128x128xf32>, vector<8x128xf32> -> vector<8x128xf32>
    %50 = vector.broadcast %48 : vector<1x128xf32> to vector<8x128xf32>
    %51 = arith.addf %49, %50 : vector<8x128xf32>
    %cst_33 = arith.constant 2.000000e+01 : f32
    %52 = vector.broadcast %cst_33 : f32 to vector<8x128xf32>
    %53 = arith.cmpf ogt, %51, %52 : vector<8x128xf32>
    %cst_34 = arith.constant 2.000000e+01 : f32
    %54 = vector.broadcast %cst_34 : f32 to vector<8x128xf32>
    %55 = arith.minimumf %51, %54 : vector<8x128xf32>
    %56 = math.exp %55 : vector<8x128xf32>
    %57 = math.log1p %56 : vector<8x128xf32>
    %58 = arith.select %53, %51, %57 : vector<8x128xi1>, vector<8x128xf32>
    %59 = arith.mulf %58, %4 : vector<8x128xf32>
    %60 = vector.extract_strided_slice %59 {offsets = [0, 0], sizes = [8, 4], strides = [1, 1]} : vector<8x128xf32> to vector<8x4xf32>
    %c0_35 = arith.constant 0 : index
    %c0_36 = arith.constant 0 : index
    %c0_37 = arith.constant 0 : index
    %61 = vector.load %arg12[%c0_35, %c0_36, %c0_37] : memref<8x4x4xf32, #tpu.memory_space<vmem>>, vector<8x4x4xf32>
    %62 = vector.shape_cast %60 : vector<8x4xf32> to vector<8x1x4xf32>
    %63 = vector.broadcast %62 : vector<8x1x4xf32> to vector<8x4x4xf32>
    %64 = arith.mulf %63, %61 : vector<8x4x4xf32>
    %cst_38 = arith.constant dense<0.000000e+00> : vector<8x4xf32>
    %65 = vector.multi_reduction <add>, %64, %cst_38 [2] : vector<8x4x4xf32> to vector<8x4xf32>
    %cst_39 = arith.constant dense<0.000000e+00> : vector<8x128xf32>
    %66 = tpu.matmul %65, %9, %cst_39 {dimension_numbers = #tpu.dot_dimension_numbers<[1], [0], [0], [1], [0, 0, 1, 1], [], []>} : vector<8x4xf32>, vector<4x128xf32>, vector<8x128xf32> -> vector<8x128xf32>
    %c0_40 = arith.constant 0 : index
    %c0_41 = arith.constant 0 : index
    %67 = vector.load %arg14[%c0_40, %c0_41] : memref<8x128xf32, #tpu.memory_space<vmem>>, vector<8x128xf32>
    tpu.vector_store %arg14[%c0_40, %c0_41], %66 {strides = array<i32>} : memref<8x128xf32, #tpu.memory_space<vmem>>, vector<8x128xf32>,
    %cst_42 = arith.constant dense<0.000000e+00> : vector<8xf32>
    %68 = vector.multi_reduction <add>, %37, %cst_42 [1] : vector<8x128xf32> to vector<8xf32>
    %69 = vector.shape_cast %68 : vector<8xf32> to vector<8x1xf32>
    %cst_43 = arith.constant 4.000000e+00 : f32
    %70 = vector.broadcast %cst_43 : f32 to vector<8x1xf32>
    %71 = arith.addf %69, %70 : vector<8x1xf32>
    %cst_44 = arith.constant dense<0.000000e+00> : vector<8xf32>
    %72 = vector.multi_reduction <add>, %66, %cst_44 [1] : vector<8x128xf32> to vector<8xf32>
    %73 = vector.shape_cast %72 : vector<8xf32> to vector<8x1xf32>
    %cst_45 = arith.constant 4.000000e+00 : f32
    %74 = vector.broadcast %cst_45 : f32 to vector<8x1xf32>
    %75 = arith.addf %73, %74 : vector<8x1xf32>
    %76 = tpu.reciprocal %71 {approx = true} : vector<8x1xf32> -> vector<8x1xf32>
    %77 = tpu.reciprocal %75 {approx = true} : vector<8x1xf32> -> vector<8x1xf32>
    %78 = vector.broadcast %76 : vector<8x1xf32> to vector<8x128xf32>
    %79 = arith.mulf %37, %78 : vector<8x128xf32>
    %80 = vector.broadcast %77 : vector<8x1xf32> to vector<8x128xf32>
    %81 = arith.mulf %66, %80 : vector<8x128xf32>
    %cst_46 = arith.constant 4.000000e+00 : f32
    %82 = vector.broadcast %cst_46 : f32 to vector<8x1xf32>
    %83 = arith.mulf %82, %76 : vector<8x1xf32>
    %cst_47 = arith.constant 4.000000e+00 : f32
    %84 = vector.broadcast %cst_47 : f32 to vector<8x1xf32>
    %85 = arith.mulf %84, %77 : vector<8x1xf32>
    %86 = arith.mulf %79, %81 : vector<8x128xf32>
    %87 = vector.broadcast %85 : vector<8x1xf32> to vector<8x128xf32>
    %88 = arith.mulf %79, %87 : vector<8x128xf32>
    %89 = arith.addf %86, %88 : vector<8x128xf32>
    %90 = vector.broadcast %83 : vector<8x1xf32> to vector<8x128xf32>
    %91 = arith.mulf %81, %90 : vector<8x128xf32>
    %92 = arith.addf %89, %91 : vector<8x128xf32>
    %93 = arith.mulf %71, %75 : vector<8x1xf32>
    %94 = vector.broadcast %93 : vector<8x1xf32> to vector<8x128xf32>
    %95 = arith.mulf %92, %94 : vector<8x128xf32>
    %cst_48 = arith.constant 2.500000e-01 : f32
    %96 = vector.broadcast %cst_48 : f32 to vector<8x128xf32>
    %97 = arith.mulf %95, %96 : vector<8x128xf32>
    %c0_49 = arith.constant 0 : index
    %c0_50 = arith.constant 0 : index
    %98 = vector.load %arg15[%c0_49, %c0_50] : memref<8x128xf32, #tpu.memory_space<vmem>>, vector<8x128xf32>
    tpu.vector_store %arg15[%c0_49, %c0_50], %97 {strides = array<i32>} : memref<8x128xf32, #tpu.memory_space<vmem>>, vector<8x128xf32>,
    return
  }
  func.func @transform_0(%arg0: i32) -> (i32, i32) {
    %c0_i32 = arith.constant 0 : i32
    %c0_i32_0 = arith.constant 0 : i32
    return %arg0, %c0_i32 : i32, i32
  }
  func.func @transform_1(%arg0: i32) -> (i32, i32) {
    %c0_i32 = arith.constant 0 : i32
    %c0_i32_0 = arith.constant 0 : i32
    %c0_i32_1 = arith.constant 0 : i32
    return %c0_i32, %c0_i32_0 : i32, i32
  }
  func.func @transform_2(%arg0: i32) -> (i32, i32) {
    %c0_i32 = arith.constant 0 : i32
    %c0_i32_0 = arith.constant 0 : i32
    %c0_i32_1 = arith.constant 0 : i32
    return %c0_i32, %c0_i32_0 : i32, i32
  }
  func.func @transform_3(%arg0: i32) -> (i32, i32) {
    %c0_i32 = arith.constant 0 : i32
    %c0_i32_0 = arith.constant 0 : i32
    %c0_i32_1 = arith.constant 0 : i32
    return %c0_i32, %c0_i32_0 : i32, i32
  }
  func.func @transform_4(%arg0: i32) -> (i32, i32) {
    %c0_i32 = arith.constant 0 : i32
    %c0_i32_0 = arith.constant 0 : i32
    %c0_i32_1 = arith.constant 0 : i32
    return %c0_i32, %c0_i32_0 : i32, i32
  }
  func.func @transform_5(%arg0: i32) -> (i32, i32) {
    %c0_i32 = arith.constant 0 : i32
    %c0_i32_0 = arith.constant 0 : i32
    return %arg0, %c0_i32 : i32, i32
  }
  func.func @transform_6(%arg0: i32) -> (i32, i32) {
    %c0_i32 = arith.constant 0 : i32
    %c0_i32_0 = arith.constant 0 : i32
    %c0_i32_1 = arith.constant 0 : i32
    return %c0_i32, %c0_i32_0 : i32, i32
  }
  func.func @transform_7(%arg0: i32) -> (i32, i32) {
    %c0_i32 = arith.constant 0 : i32
    %c0_i32_0 = arith.constant 0 : i32
    %c0_i32_1 = arith.constant 0 : i32
    return %c0_i32, %c0_i32_0 : i32, i32
  }
  func.func @transform_8(%arg0: i32) -> (i32, i32) {
    %c0_i32 = arith.constant 0 : i32
    %c0_i32_0 = arith.constant 0 : i32
    %c0_i32_1 = arith.constant 0 : i32
    return %c0_i32, %c0_i32_0 : i32, i32
  }
  func.func @transform_9(%arg0: i32) -> (i32, i32) {
    %c0_i32 = arith.constant 0 : i32
    %c0_i32_0 = arith.constant 0 : i32
    %c0_i32_1 = arith.constant 0 : i32
    return %c0_i32, %c0_i32_0 : i32, i32
  }
  func.func @transform_10(%arg0: i32) -> (i32, i32, i32) {
    %c0_i32 = arith.constant 0 : i32
    %c0_i32_0 = arith.constant 0 : i32
    %c0_i32_1 = arith.constant 0 : i32
    return %arg0, %c0_i32, %c0_i32_0 : i32, i32, i32
  }
  func.func @transform_11(%arg0: i32) -> (i32, i32, i32) {
    %c0_i32 = arith.constant 0 : i32
    %c0_i32_0 = arith.constant 0 : i32
    %c0_i32_1 = arith.constant 0 : i32
    return %arg0, %c0_i32, %c0_i32_0 : i32, i32, i32
  }
  func.func @transform_12(%arg0: i32) -> (i32, i32) {
    %c0_i32 = arith.constant 0 : i32
    %c0_i32_0 = arith.constant 0 : i32
    return %arg0, %c0_i32 : i32, i32
  }
  func.func @transform_13(%arg0: i32) -> (i32, i32) {
    %c0_i32 = arith.constant 0 : i32
    %c0_i32_0 = arith.constant 0 : i32
    return %arg0, %c0_i32 : i32, i32
  }
  func.func @transform_14(%arg0: i32) -> (i32, i32) {
    %c0_i32 = arith.constant 0 : i32
    %c0_i32_0 = arith.constant 0 : i32
    return %arg0, %c0_i32 : i32, i32
  }
}

</mosaic_0001>

<llo_original>
// kernel: tmnr_forward.1
$region0: #{tmnr_forward.1}
  #allocation0 [shape = 'u32[]', space=smem, size = 0x4, offset = 0x4, fixed_abs, tag = 'smem constant byte address 0x4 - core index']
  #allocation1 [shape = 'u32[72,128]{1,0:T(1,128)}', space=vmem, size = 0x9000, scoped, tag = 'internal scratch']
  %s0 = inlined_call_operand.vmem [shape: f32[8,128], index: 0, kind: input, shape index: {}]
  %s1 = inlined_call_operand.vmem [shape: f32[128,128], index: 1, kind: input, shape index: {}]
  %s2 = inlined_call_operand.vmem [shape: f32[1,128], index: 2, kind: input, shape index: {}]
  %s3 = inlined_call_operand.vmem [shape: f32[128,128], index: 3, kind: input, shape index: {}]
  %s4 = inlined_call_operand.vmem [shape: f32[1,128], index: 4, kind: input, shape index: {}]
  %s5 = inlined_call_operand.vmem [shape: f32[8,128], index: 5, kind: input, shape index: {}]
  %s6 = inlined_call_operand.vmem [shape: f32[128,128], index: 6, kind: input, shape index: {}]
  %s7 = inlined_call_operand.vmem [shape: f32[1,128], index: 7, kind: input, shape index: {}]
  %s8 = inlined_call_operand.vmem [shape: f32[128,128], index: 8, kind: input, shape index: {}]
  %s9 = inlined_call_operand.vmem [shape: f32[1,128], index: 9, kind: input, shape index: {}]
  %s10 = inlined_call_operand.vmem [shape: f32[8,4,4], index: 10, kind: input, shape index: {}]
  %s11 = inlined_call_operand.vmem [shape: f32[8,4,4], index: 11, kind: input, shape index: {}]
  %s12 = inlined_call_operand.vmem [shape: f32[8,128], index: 12, kind: output, shape index: {0}]
  %s13 = inlined_call_operand.vmem [shape: f32[8,128], index: 13, kind: output, shape index: {1}]
  %s14 = inlined_call_operand.vmem [shape: f32[8,128], index: 14, kind: output, shape index: {2}]
  %15 = xla_tuple %s12, %s13, %s14
  %s16 = sld [smem:[#allocation0]]
  $region74: #{tmnr_forward.1} parent=0
    _
  %s18 = ssub.s32 1, %s16
  %s19 = scalar_select 0, %s18, %s16
  // Predicated region
  $region2: #{tmnr_forward.1} parent=0 // pred_check
    _
  $region3: #{tmnr_forward.1} parent=0 // pred_check_branch
    %21 = sbr.rel (0) target = $region5
  $region4: #{tmnr_forward.1} parent=0 // pred_region
    _
  $region5: #{tmnr_forward.1} parent=0 // pred_fallthru
    _
  // Predicated region
  $region6: #{tmnr_forward.1} parent=0 // pred_check
    _
  $region7: #{tmnr_forward.1} parent=0 // pred_check_branch
    %23 = sbr.rel (0) target = $region9
  $region8: #{tmnr_forward.1} parent=0 // pred_region
    _
  $region9: #{tmnr_forward.1} parent=0 // pred_fallthru
    _
  // Predicated region
  $region10: #{tmnr_forward.1} parent=0 // pred_check
    _
  $region11: #{tmnr_forward.1} parent=0 // pred_check_branch
    %25 = sbr.rel (0) target = $region13
  $region12: #{tmnr_forward.1} parent=0 // pred_region
    _
  $region13: #{tmnr_forward.1} parent=0 // pred_fallthru
    _
  // Predicated region
  $region14: #{tmnr_forward.1} parent=0 // pred_check
    _
  $region15: #{tmnr_forward.1} parent=0 // pred_check_branch
    %27 = sbr.rel (0) target = $region17
  $region16: #{tmnr_forward.1} parent=0 // pred_region
    _
  $region17: #{tmnr_forward.1} parent=0 // pred_fallthru
    _
  // Predicated region
  $region18: #{tmnr_forward.1} parent=0 // pred_check
    _
  $region19: #{tmnr_forward.1} parent=0 // pred_check_branch
    %29 = sbr.rel (0) target = $region21
  $region20: #{tmnr_forward.1} parent=0 // pred_region
    _
  $region21: #{tmnr_forward.1} parent=0 // pred_fallthru
    _
  // Predicated region
  $region22: #{tmnr_forward.1} parent=0 // pred_check
    _
  $region23: #{tmnr_forward.1} parent=0 // pred_check_branch
    %31 = sbr.rel (0) target = $region25
  $region24: #{tmnr_forward.1} parent=0 // pred_region
    _
  $region25: #{tmnr_forward.1} parent=0 // pred_fallthru
    _
  // Predicated region
  $region26: #{tmnr_forward.1} parent=0 // pred_check
    _
  $region27: #{tmnr_forward.1} parent=0 // pred_check_branch
    %33 = sbr.rel (0) target = $region29
  $region28: #{tmnr_forward.1} parent=0 // pred_region
    _
  $region29: #{tmnr_forward.1} parent=0 // pred_fallthru
    _
  // Predicated region
  $region30: #{tmnr_forward.1} parent=0 // pred_check
    _
  $region31: #{tmnr_forward.1} parent=0 // pred_check_branch
    %35 = sbr.rel (0) target = $region33
  $region32: #{tmnr_forward.1} parent=0 // pred_region
    _
  $region33: #{tmnr_forward.1} parent=0 // pred_fallthru
    _
  // Predicated region
  $region34: #{tmnr_forward.1} parent=0 // pred_check
    _
  $region35: #{tmnr_forward.1} parent=0 // pred_check_branch
    %37 = sbr.rel (0) target = $region37
  $region36: #{tmnr_forward.1} parent=0 // pred_region
    _
  $region37: #{tmnr_forward.1} parent=0 // pred_fallthru
    _
  // Predicated region
  $region38: #{tmnr_forward.1} parent=0 // pred_check
    _
  $region39: #{tmnr_forward.1} parent=0 // pred_check_branch
    %39 = sbr.rel (0) target = $region41
  $region40: #{tmnr_forward.1} parent=0 // pred_region
    _
  $region41: #{tmnr_forward.1} parent=0 // pred_fallthru
    _
  // Predicated region
  $region42: #{tmnr_forward.1} parent=0 // pred_check
    _
  $region43: #{tmnr_forward.1} parent=0 // pred_check_branch
    %41 = sbr.rel (0) target = $region45
  $region44: #{tmnr_forward.1} parent=0 // pred_region
    _
  $region45: #{tmnr_forward.1} parent=0 // pred_fallthru
    _
  // Predicated region
  $region46: #{tmnr_forward.1} parent=0 // pred_check
    _
  $region47: #{tmnr_forward.1} parent=0 // pred_check_branch
    %43 = sbr.rel (0) target = $region49
  $region48: #{tmnr_forward.1} parent=0 // pred_region
    _
  $region49: #{tmnr_forward.1} parent=0 // pred_fallthru
    _
  %v44 = vlaneseq
  %v45 = vand.u32 %v44, 127
  %vm46 = vcmp.lt.s32.totalorder %v45, 4
  %v47 = vsel %vm46, 1, 0
  %v48 = vcvt.s32.f32 %v47
  %v49 = vlaneseq
  %v50 = vshrl.u32 %v49, 7
  %vm51 = vcmp.eq.s32.totalorder %v50, %v45
  %v52 = vsel %vm51, 1, 0
  %v53 = vcvt.s32.f32 %v52
  %v54 = vld [vmem:[%s0] sm:$0xff]
  %v55 = vld [vmem:[%s1] sm:$0xff]
  %v56 = vld [vmem:[%s1 + $0x8] sm:$0xff]
  %v57 = vld [vmem:[%s1 + $0x10] sm:$0xff]
  %v58 = vld [vmem:[%s1 + $0x18] sm:$0xff]
  %v59 = vld [vmem:[%s1 + $0x20] sm:$0xff]
  %v60 = vld [vmem:[%s1 + $0x28] sm:$0xff]
  %v61 = vld [vmem:[%s1 + $0x30] sm:$0xff]
  %v62 = vld [vmem:[%s1 + $0x38] sm:$0xff]
  %v63 = vld [vmem:[%s1 + $0x40] sm:$0xff]
  %v64 = vld [vmem:[%s1 + $0x48] sm:$0xff]
  %v65 = vld [vmem:[%s1 + $0x50] sm:$0xff]
  %v66 = vld [vmem:[%s1 + $0x58] sm:$0xff]
  %v67 = vld [vmem:[%s1 + $0x60] sm:$0xff]
  %v68 = vld [vmem:[%s1 + $0x68] sm:$0xff]
  %v69 = vld [vmem:[%s1 + $0x70] sm:$0xff]
  %v70 = vld [vmem:[%s1 + $0x78] sm:$0xff]
  %v71 = vld [vmem:[%s2] sm:$0x1]
  %v73 = vperm.slane %v71, 0
  %75 = vmatpush.msra.mxu0 %v70
  %76 = vmatpush.msra.mxu0 %v69
  %77 = vmatpush.msra.mxu0 %v68
  %78 = vmatpush.msra.mxu0 %v67
  %79 = vmatpush.msra.mxu0 %v66
  %80 = vmatpush.msra.mxu0 %v65
  %81 = vmatpush.msra.mxu0 %v64
  %82 = vmatpush.msra.mxu0 %v63
  %83 = vmatpush.msra.mxu0 %v62
  %84 = vmatpush.msra.mxu0 %v61
  %85 = vmatpush.msra.mxu0 %v60
  %86 = vmatpush.msra.mxu0 %v59
  %87 = vmatpush.msra.mxu0 %v58
  %88 = vmatpush.msra.mxu0 %v57
  %89 = vmatpush.msra.mxu0 %v56
  %90 = vmatpush.msra.mxu0 %v55
  %91 = vmatmul.f32.gmra.mxu0 %v54
  %v92 = vpop.f32.mrf.mxu0
  %v93 = vadd.f32 %v73, %v92
  %94 = vdwg.mxu0
  %v95 = vmax.f32 %v93, 0.0
  %v96 = vld [vmem:[%s3] sm:$0xff]
  %v97 = vld [vmem:[%s3 + $0x8] sm:$0xff]
  %v98 = vld [vmem:[%s3 + $0x10] sm:$0xff]
  %v99 = vld [vmem:[%s3 + $0x18] sm:$0xff]
  %v100 = vld [vmem:[%s3 + $0x20] sm:$0xff]
  %v101 = vld [vmem:[%s3 + $0x28] sm:$0xff]
  %v102 = vld [vmem:[%s3 + $0x30] sm:$0xff]
  %v103 = vld [vmem:[%s3 + $0x38] sm:$0xff]
  %v104 = vld [vmem:[%s3 + $0x40] sm:$0xff]
  %v105 = vld [vmem:[%s3 + $0x48] sm:$0xff]
  %v106 = vld [vmem:[%s3 + $0x50] sm:$0xff]
  %v107 = vld [vmem:[%s3 + $0x58] sm:$0xff]
  %v108 = vld [vmem:[%s3 + $0x60] sm:$0xff]
  %v109 = vld [vmem:[%s3 + $0x68] sm:$0xff]
  %v110 = vld [vmem:[%s3 + $0x70] sm:$0xff]
  %v111 = vld [vmem:[%s3 + $0x78] sm:$0xff]
  %v112 = vld [vmem:[%s4] sm:$0x1]
  %v114 = vperm.slane %v112, 0
  %116 = vmatpush.msra.mxu0 %v111
  %117 = vmatpush.msra.mxu0 %v110
  %118 = vmatpush.msra.mxu0 %v109
  %119 = vmatpush.msra.mxu0 %v108
  %120 = vmatpush.msra.mxu0 %v107
  %121 = vmatpush.msra.mxu0 %v106
  %122 = vmatpush.msra.mxu0 %v105
  %123 = vmatpush.msra.mxu0 %v104
  %124 = vmatpush.msra.mxu0 %v103
  %125 = vmatpush.msra.mxu0 %v102
  %126 = vmatpush.msra.mxu0 %v101
  %127 = vmatpush.msra.mxu0 %v100
  %128 = vmatpush.msra.mxu0 %v99
  %129 = vmatpush.msra.mxu0 %v98
  %130 = vmatpush.msra.mxu0 %v97
  %131 = vmatpush.msra.mxu0 %v96
  %132 = vmatmul.f32.gmra.mxu0 %v95
  %v133 = vpop.f32.mrf.mxu0
  %v134 = vadd.f32 %v114, %v133
  %135 = vdwg.mxu0
  %vm136 = vcmp.gt.f32.partialorder %v134, 20.0
  %v137 = vmin.f32 %v134, 20.0
  %v138 = vmul.f32 %v137, 1.442695
  %v139 = vpow.pop %v138
  %v140 = vadd.f32 %v139, 1.0
  %v141 = vlog2.pop %v140
  %v142 = vmul.f32 %v141, 0.6931472
  %v143 = vmul.f32 -0.5, %v139
  %v144 = vadd.f32 %v143, 1.0
  %v145 = vmul.f32 %v144, %v139
  %v146 = vand.u32 2147483647, %v139
  %vm147 = vcmp.lt.f32.partialorder %v146, 0.0004427343
  %v148 = vsel %vm147, %v145, %v142
  %v149 = vsel %vm136, %v134, %v148
  %v150 = vmul.f32 %v149, %v48
  %v151 = vld [vmem:[%s10] sm:$0xf]
  %v152 = vld [vmem:[%s10 + $0x4] sm:$0xf]
  %v153 = vld [vmem:[%s10 + $0x8] sm:$0xf]
  %v154 = vld [vmem:[%s10 + $0xc] sm:$0xf]
  %v155 = vld [vmem:[%s10 + $0x10] sm:$0xf]
  %v156 = vld [vmem:[%s10 + $0x14] sm:$0xf]
  %v157 = vld [vmem:[%s10 + $0x18] sm:$0xf]
  %v158 = vld [vmem:[%s10 + $0x1c] sm:$0xf]
  %v160 = vrot.slane %v150, 1
  %v161 = vrot.slane %v150, 2
  %v162 = vrot.slane %v150, 3
  %v163 = vrot.slane %v150, 4
  %v164 = vrot.slane %v150, 5
  %v165 = vrot.slane %v150, 6
  %v166 = vrot.slane %v150, 7
  %v167 = vperm.slane %v150, 0
  %v168 = vperm.slane %v160, 0
  %v169 = vperm.slane %v161, 0
  %v170 = vperm.slane %v162, 0
  %v171 = vperm.slane %v163, 0
  %v172 = vperm.slane %v164, 0
  %v173 = vperm.slane %v165, 0
  %v174 = vperm.slane %v166, 0
  %v183 = vmul.f32 %v167, %v151
  %v184 = vmul.f32 %v168, %v152
  %v185 = vmul.f32 %v169, %v153
  %v186 = vmul.f32 %v170, %v154
  %v187 = vmul.f32 %v171, %v155
  %v188 = vmul.f32 %v172, %v156
  %v189 = vmul.f32 %v173, %v157
  %v190 = vmul.f32 %v174, %v158
  %vm191 = vcmask 27648
  %v192 = vsel %vm191, %v183, 0.0
  %193 = vadd.xlane.f32.xlu0 %v192
  %v194 = vpop.xlane.xlu0 %193
  %v195 = vsel %vm191, %v184, 0.0
  %196 = vadd.xlane.f32.xlu0 %v195
  %v197 = vpop.xlane.xlu0 %196
  %v198 = vsel %vm191, %v185, 0.0
  %199 = vadd.xlane.f32.xlu0 %v198
  %v200 = vpop.xlane.xlu0 %199
  %v201 = vsel %vm191, %v186, 0.0
  %202 = vadd.xlane.f32.xlu0 %v201
  %v203 = vpop.xlane.xlu0 %202
  %v204 = vsel %vm191, %v187, 0.0
  %205 = vadd.xlane.f32.xlu0 %v204
  %v206 = vpop.xlane.xlu0 %205
  %v207 = vsel %vm191, %v188, 0.0
  %208 = vadd.xlane.f32.xlu0 %v207
  %v209 = vpop.xlane.xlu0 %208
  %v210 = vsel %vm191, %v189, 0.0
  %211 = vadd.xlane.f32.xlu0 %v210
  %v212 = vpop.xlane.xlu0 %211
  %v213 = vsel %vm191, %v190, 0.0
  %214 = vadd.xlane.f32.xlu0 %v213
  %v215 = vpop.xlane.xlu0 %214
  %v224 = vperm.slane %v194, %v45
  %v225 = vperm.slane %v197, %v45
  %v226 = vperm.slane %v200, %v45
  %v227 = vperm.slane %v203, %v45
  %v228 = vperm.slane %v206, %v45
  %v229 = vperm.slane %v209, %v45
  %v230 = vperm.slane %v212, %v45
  %v231 = vperm.slane %v215, %v45
  %vm232 = vcmask 1041409
  %v233 = vsel %vm232, %v225, %v224
  %vm234 = vcmask 1042434
  %v235 = vsel %vm234, %v226, %v233
  %vm236 = vcmask 1043459
  %v237 = vsel %vm236, %v227, %v235
  %vm238 = vcmask 1044484
  %v239 = vsel %vm238, %v228, %v237
  %vm240 = vcmask 1045509
  %v241 = vsel %vm240, %v229, %v239
  %vm242 = vcmask 1046534
  %v243 = vsel %vm242, %v230, %v241
  %vm244 = vcmask 1047559
  %v245 = vsel %vm244, %v231, %v243
  %vm246 = vcmask 31744
  %v247 = vsel %vm246, %v245, 0
  %vm249 = vcmask 1043456
  %v251 = vsel %vm249, %v53, 0
  %253 = vmatpush.msra.mxu0 0.0
  %254 = vmatpush.msra.mxu0 0.0
  %255 = vmatpush.msra.mxu0 0.0
  %256 = vmatpush.msra.mxu0 0.0
  %257 = vmatpush.msra.mxu0 0.0
  %258 = vmatpush.msra.mxu0 0.0
  %259 = vmatpush.msra.mxu0 0.0
  %260 = vmatpush.msra.mxu0 0.0
  %261 = vmatpush.msra.mxu0 0.0
  %262 = vmatpush.msra.mxu0 0.0
  %263 = vmatpush.msra.mxu0 0.0
  %264 = vmatpush.msra.mxu0 0.0
  %265 = vmatpush.msra.mxu0 0.0
  %266 = vmatpush.msra.mxu0 0.0
  %267 = vmatpush.msra.mxu0 0.0
  %268 = vmatpush.msra.mxu0 %v251
  %269 = vmatmul.f32.gmra.mxu0 %v247
  %v270 = vpop.f32.mrf.mxu0
  %v271 = vadd.f32 0.0, %v270
  %272 = vdwg.mxu0
  %273 = vst [vmem:[%s12] sm:$0xff] %v271
  %v274 = vld [vmem:[%s5] sm:$0xff]
  %v275 = vld [vmem:[%s6] sm:$0xff]
  %v276 = vld [vmem:[%s6 + $0x8] sm:$0xff]
  %v277 = vld [vmem:[%s6 + $0x10] sm:$0xff]
  %v278 = vld [vmem:[%s6 + $0x18] sm:$0xff]
  %v279 = vld [vmem:[%s6 + $0x20] sm:$0xff]
  %v280 = vld [vmem:[%s6 + $0x28] sm:$0xff]
  %v281 = vld [vmem:[%s6 + $0x30] sm:$0xff]
  %v282 = vld [vmem:[%s6 + $0x38] sm:$0xff]
  %v283 = vld [vmem:[%s6 + $0x40] sm:$0xff]
  %v284 = vld [vmem:[%s6 + $0x48] sm:$0xff]
  %v285 = vld [vmem:[%s6 + $0x50] sm:$0xff]
  %v286 = vld [vmem:[%s6 + $0x58] sm:$0xff]
  %v287 = vld [vmem:[%s6 + $0x60] sm:$0xff]
  %v288 = vld [vmem:[%s6 + $0x68] sm:$0xff]
  %v289 = vld [vmem:[%s6 + $0x70] sm:$0xff]
  %v290 = vld [vmem:[%s6 + $0x78] sm:$0xff]
  %v291 = vld [vmem:[%s7] sm:$0x1]
  %v293 = vperm.slane %v291, 0
  %295 = vmatpush.msra.mxu0 %v290
  %296 = vmatpush.msra.mxu0 %v289
  %297 = vmatpush.msra.mxu0 %v288
  %298 = vmatpush.msra.mxu0 %v287
  %299 = vmatpush.msra.mxu0 %v286
  %300 = vmatpush.msra.mxu0 %v285
  %301 = vmatpush.msra.mxu0 %v284
  %302 = vmatpush.msra.mxu0 %v283
  %303 = vmatpush.msra.mxu0 %v282
  %304 = vmatpush.msra.mxu0 %v281
  %305 = vmatpush.msra.mxu0 %v280
  %306 = vmatpush.msra.mxu0 %v279
  %307 = vmatpush.msra.mxu0 %v278
  %308 = vmatpush.msra.mxu0 %v277
  %309 = vmatpush.msra.mxu0 %v276
  %310 = vmatpush.msra.mxu0 %v275
  %311 = vmatmul.f32.gmra.mxu0 %v274
  %v312 = vpop.f32.mrf.mxu0
  %v313 = vadd.f32 %v293, %v312
  %314 = vdwg.mxu0
  %v315 = vmax.f32 %v313, 0.0
  %v316 = vld [vmem:[%s8] sm:$0xff]
  %v317 = vld [vmem:[%s8 + $0x8] sm:$0xff]
  %v318 = vld [vmem:[%s8 + $0x10] sm:$0xff]
  %v319 = vld [vmem:[%s8 + $0x18] sm:$0xff]
  %v320 = vld [vmem:[%s8 + $0x20] sm:$0xff]
  %v321 = vld [vmem:[%s8 + $0x28] sm:$0xff]
  %v322 = vld [vmem:[%s8 + $0x30] sm:$0xff]
  %v323 = vld [vmem:[%s8 + $0x38] sm:$0xff]
  %v324 = vld [vmem:[%s8 + $0x40] sm:$0xff]
  %v325 = vld [vmem:[%s8 + $0x48] sm:$0xff]
  %v326 = vld [vmem:[%s8 + $0x50] sm:$0xff]
  %v327 = vld [vmem:[%s8 + $0x58] sm:$0xff]
  %v328 = vld [vmem:[%s8 + $0x60] sm:$0xff]
  %v329 = vld [vmem:[%s8 + $0x68] sm:$0xff]
  %v330 = vld [vmem:[%s8 + $0x70] sm:$0xff]
  %v331 = vld [vmem:[%s8 + $0x78] sm:$0xff]
  %v332 = vld [vmem:[%s9] sm:$0x1]
  %v334 = vperm.slane %v332, 0
  %336 = vmatpush.msra.mxu0 %v331
  %337 = vmatpush.msra.mxu0 %v330
  %338 = vmatpush.msra.mxu0 %v329
  %339 = vmatpush.msra.mxu0 %v328
  %340 = vmatpush.msra.mxu0 %v327
  %341 = vmatpush.msra.mxu0 %v326
  %342 = vmatpush.msra.mxu0 %v325
  %343 = vmatpush.msra.mxu0 %v324
  %344 = vmatpush.msra.mxu0 %v323
  %345 = vmatpush.msra.mxu0 %v322
  %346 = vmatpush.msra.mxu0 %v321
  %347 = vmatpush.msra.mxu0 %v320
  %348 = vmatpush.msra.mxu0 %v319
  %349 = vmatpush.msra.mxu0 %v318
  %350 = vmatpush.msra.mxu0 %v317
  %351 = vmatpush.msra.mxu0 %v316
  %352 = vmatmul.f32.gmra.mxu0 %v315
  %v353 = vpop.f32.mrf.mxu0
  %v354 = vadd.f32 %v334, %v353
  %355 = vdwg.mxu0
  %vm356 = vcmp.gt.f32.partialorder %v354, 20.0
  %v357 = vmin.f32 %v354, 20.0
  %v358 = vmul.f32 %v357, 1.442695
  %v359 = vpow.pop %v358
  %v360 = vadd.f32 %v359, 1.0
  %v361 = vlog2.pop %v360
  %v362 = vmul.f32 %v361, 0.6931472
  %v363 = vmul.f32 -0.5, %v359
  %v364 = vadd.f32 %v363, 1.0
  %v365 = vmul.f32 %v364, %v359
  %v366 = vand.u32 2147483647, %v359
  %vm367 = vcmp.lt.f32.partialorder %v366, 0.0004427343
  %v368 = vsel %vm367, %v365, %v362
  %v369 = vsel %vm356, %v354, %v368
  %v370 = vmul.f32 %v369, %v48
  %v371 = vld [vmem:[%s11] sm:$0xf]
  %v372 = vld [vmem:[%s11 + $0x4] sm:$0xf]
  %v373 = vld [vmem:[%s11 + $0x8] sm:$0xf]
  %v374 = vld [vmem:[%s11 + $0xc] sm:$0xf]
  %v375 = vld [vmem:[%s11 + $0x10] sm:$0xf]
  %v376 = vld [vmem:[%s11 + $0x14] sm:$0xf]
  %v377 = vld [vmem:[%s11 + $0x18] sm:$0xf]
  %v378 = vld [vmem:[%s11 + $0x1c] sm:$0xf]
  %v380 = vrot.slane %v370, 1
  %v381 = vrot.slane %v370, 2
  %v382 = vrot.slane %v370, 3
  %v383 = vrot.slane %v370, 4
  %v384 = vrot.slane %v370, 5
  %v385 = vrot.slane %v370, 6
  %v386 = vrot.slane %v370, 7
  %v387 = vperm.slane %v370, 0
  %v388 = vperm.slane %v380, 0
  %v389 = vperm.slane %v381, 0
  %v390 = vperm.slane %v382, 0
  %v391 = vperm.slane %v383, 0
  %v392 = vperm.slane %v384, 0
  %v393 = vperm.slane %v385, 0
  %v394 = vperm.slane %v386, 0
  %v403 = vmul.f32 %v387, %v371
  %v404 = vmul.f32 %v388, %v372
  %v405 = vmul.f32 %v389, %v373
  %v406 = vmul.f32 %v390, %v374
  %v407 = vmul.f32 %v391, %v375
  %v408 = vmul.f32 %v392, %v376
  %v409 = vmul.f32 %v393, %v377
  %v410 = vmul.f32 %v394, %v378
  %v411 = vsel %vm191, %v403, 0.0
  %412 = vadd.xlane.f32.xlu0 %v411
  %v413 = vpop.xlane.xlu0 %412
  %v414 = vsel %vm191, %v404, 0.0
  %415 = vadd.xlane.f32.xlu0 %v414
  %v416 = vpop.xlane.xlu0 %415
  %v417 = vsel %vm191, %v405, 0.0
  %418 = vadd.xlane.f32.xlu0 %v417
  %v419 = vpop.xlane.xlu0 %418
  %v420 = vsel %vm191, %v406, 0.0
  %421 = vadd.xlane.f32.xlu0 %v420
  %v422 = vpop.xlane.xlu0 %421
  %v423 = vsel %vm191, %v407, 0.0
  %424 = vadd.xlane.f32.xlu0 %v423
  %v425 = vpop.xlane.xlu0 %424
  %v426 = vsel %vm191, %v408, 0.0
  %427 = vadd.xlane.f32.xlu0 %v426
  %v428 = vpop.xlane.xlu0 %427
  %v429 = vsel %vm191, %v409, 0.0
  %430 = vadd.xlane.f32.xlu0 %v429
  %v431 = vpop.xlane.xlu0 %430
  %v432 = vsel %vm191, %v410, 0.0
  %433 = vadd.xlane.f32.xlu0 %v432
  %v434 = vpop.xlane.xlu0 %433
  %v443 = vperm.slane %v413, %v45
  %v444 = vperm.slane %v416, %v45
  %v445 = vperm.slane %v419, %v45
  %v446 = vperm.slane %v422, %v45
  %v447 = vperm.slane %v425, %v45
  %v448 = vperm.slane %v428, %v45
  %v449 = vperm.slane %v431, %v45
  %v450 = vperm.slane %v434, %v45
  %v451 = vsel %vm232, %v444, %v443
  %v452 = vsel %vm234, %v445, %v451
  %v453 = vsel %vm236, %v446, %v452
  %v454 = vsel %vm238, %v447, %v453
  %v455 = vsel %vm240, %v448, %v454
  %v456 = vsel %vm242, %v449, %v455
  %v457 = vsel %vm244, %v450, %v456
  %v458 = vsel %vm246, %v457, 0
  %460 = vmatpush.msra.mxu0 0.0
  %461 = vmatpush.msra.mxu0 0.0
  %462 = vmatpush.msra.mxu0 0.0
  %463 = vmatpush.msra.mxu0 0.0
  %464 = vmatpush.msra.mxu0 0.0
  %465 = vmatpush.msra.mxu0 0.0
  %466 = vmatpush.msra.mxu0 0.0
  %467 = vmatpush.msra.mxu0 0.0
  %468 = vmatpush.msra.mxu0 0.0
  %469 = vmatpush.msra.mxu0 0.0
  %470 = vmatpush.msra.mxu0 0.0
  %471 = vmatpush.msra.mxu0 0.0
  %472 = vmatpush.msra.mxu0 0.0
  %473 = vmatpush.msra.mxu0 0.0
  %474 = vmatpush.msra.mxu0 0.0
  %475 = vmatpush.msra.mxu0 %v251
  %476 = vmatmul.f32.gmra.mxu0 %v458
  %v477 = vpop.f32.mrf.mxu0
  %v478 = vadd.f32 0.0, %v477
  %479 = vdwg.mxu0
  %480 = vst [vmem:[%s13] sm:$0xff] %v478
  %481 = vadd.xlane.f32.xlu0 %v271
  %v482 = vpop.xlane.xlu0 %481
  %v483 = vadd.f32 %v482, 4.0
  %484 = vadd.xlane.f32.xlu0 %v478
  %v485 = vpop.xlane.xlu0 %484
  %v486 = vadd.f32 %v485, 4.0
  %v487 = vrcp.pop %v483
  %v488 = vrcp.pop %v486
  %v489 = vmul.f32 %v271, %v487
  %v490 = vmul.f32 %v478, %v488
  %v491 = vmul.f32 %v487, 4.0
  %v492 = vmul.f32 %v488, 4.0
  %v493 = vmul.f32 %v489, %v490
  %v494 = vmul.f32 %v489, %v492
  %v495 = vadd.f32 %v493, %v494
  %v496 = vmul.f32 %v490, %v491
  %v497 = vadd.f32 %v495, %v496
  %v498 = vmul.f32 %v483, %v486
  %v499 = vmul.f32 %v497, %v498
  %v500 = vmul.f32 %v499, 0.25
  %501 = vst [vmem:[%s14] sm:$0xff] %v500
  // Predicated region
  $region50: #{tmnr_forward.1} parent=0 // pred_check
    _
  $region51: #{tmnr_forward.1} parent=0 // pred_check_branch
    %503 = sbr.rel (0) target = $region53
  $region52: #{tmnr_forward.1} parent=0 // pred_region
    _
  $region53: #{tmnr_forward.1} parent=0 // pred_fallthru
    _
  // Predicated region
  $region54: #{tmnr_forward.1} parent=0 // pred_check
    _
  $region55: #{tmnr_forward.1} parent=0 // pred_check_branch
    %505 = sbr.rel (0) target = $region57
  $region56: #{tmnr_forward.1} parent=0 // pred_region
    _
  $region57: #{tmnr_forward.1} parent=0 // pred_fallthru
    _
  // Predicated region
  $region58: #{tmnr_forward.1} parent=0 // pred_check
    _
  $region59: #{tmnr_forward.1} parent=0 // pred_check_branch
    %507 = sbr.rel (0) target = $region61
  $region60: #{tmnr_forward.1} parent=0 // pred_region
    _
  $region61: #{tmnr_forward.1} parent=0 // pred_fallthru
    _
  // Predicated region
  $region62: #{tmnr_forward.1} parent=0 // pred_check
    _
  $region63: #{tmnr_forward.1} parent=0 // pred_check_branch
    %509 = sbr.rel (0) target = $region65
  $region64: #{tmnr_forward.1} parent=0 // pred_region
    _
  $region65: #{tmnr_forward.1} parent=0 // pred_fallthru
    _
  // Predicated region
  $region66: #{tmnr_forward.1} parent=0 // pred_check
    _
  $region67: #{tmnr_forward.1} parent=0 // pred_check_branch
    %511 = sbr.rel (0) target = $region69
  $region68: #{tmnr_forward.1} parent=0 // pred_region
    _
  $region69: #{tmnr_forward.1} parent=0 // pred_fallthru
    _
  // Predicated region
  $region70: #{tmnr_forward.1} parent=0 // pred_check
    _
  $region71: #{tmnr_forward.1} parent=0 // pred_check_branch
    %513 = sbr.rel (0) target = $region73
  $region72: #{tmnr_forward.1} parent=0 // pred_region
    _
  $region73: #{tmnr_forward.1} parent=0 // pred_fallthru
    _

</llo_original>
